<compile_context>
chip_gen: v7x
topology: tpu7x:2x2x1
jax: 0.10.0
libtpu: 0.0.40
codegen_flags: <defaults>
</compile_context>

<pallas_src>
import functools

import jax
import jax.numpy as jnp
from jax.experimental import pallas as pl
from jax.experimental.pallas import tpu as pltpu

EPS = 1e-20


def _dvae_kernel(xxp_ref, gum_ref, w1_ref, b1_ref, gones_ref, w234_ref,
                 w4a_ref, w4bc_ref, b4_ref, lp_ref,
                 s_ref, wid_ref, loss_ref,
                 *, S, M, K, temperature, n_valid):
    f32 = jnp.float32
    bf16 = jnp.bfloat16
    MK = M * K

    xxp = xxp_ref[...]                                    # [TN, 2S] f32 (x | x_parent)
    x = xxp[:, :S]                                        # [TN, S]
    TN = xxp.shape[0]

    # ---- linear1 (bf16 on MXU, f32 accumulate) -> [TN, M*K] lane-dense ----
    l = jnp.dot(x.astype(bf16), w1_ref[...],
                preferred_element_type=f32) + b1_ref[...]

    # ---- tanh + log_softmax over each K-lane group (no relayout) ----------
    # tanh is bounded in [-1, 1] -> exp is overflow-safe without max-subtraction.
    qt = jnp.tanh(l)
    eq = jnp.exp(qt)
    zq = jnp.dot(eq.astype(bf16), gones_ref[...],         # segmented sum + bcast
                 preferred_element_type=f32)
    q = qt - jnp.log(zq)                                  # log_softmax(tanh(l))

    # ---- gumbel softmax over each K-group (noise streamed from wrapper) ---
    # q and the gumbel noise are bounded -> max-free softmax is safe unless
    # temperature is made extremely small (<~5e-3).
    t = (q + gum_ref[...]) * (1.0 / temperature)
    et = jnp.exp(t)
    zt = jnp.dot(et.astype(bf16), gones_ref[...],
                 preferred_element_type=f32)
    w = et / zt                                           # softmax(temp) per group
    log_w = t - jnp.log(zt)                               # reuse: log(w + eps)

    # ---- per-group argmax (first max index), +1 ---------------------------
    # argmax(w) == argmax(t); only this step touches the (TN, M, K) layout.
    t3 = t.reshape(TN, M, K)
    tmax = jnp.max(t3, axis=2, keepdims=True)
    kio = jax.lax.broadcasted_iota(jnp.int32, (TN, M, K), 2)
    wid_i = jnp.min(jnp.where(t3 >= tmax, kio, K), axis=2)  # [TN, M] int32
    w_id = wid_i.astype(f32) + 1.0                           # [TN, M] f32

    # ---- fused interaction / gate matmul (single [M, 4S] weight) ----------
    ig = jnp.dot(w_id.astype(bf16), w234_ref[...],
                 preferred_element_type=f32)              # [TN, 4S]
    inter = ig[:, :2 * S] * (1.0 / 300.0)                 # linear2(w_id) / 300
    gate = jax.nn.sigmoid(ig[:, 2 * S:])                  # sigmoid(linear3(w_id))
    ctx = gate * xxp                                      # gate * [x, x_parent]

    # ---- reconstruction, padded to a lane-dense 128-lane slab -------------
    s_full = (jnp.dot(inter.astype(bf16), w4a_ref[...], preferred_element_type=f32)
              + jnp.dot(ctx.astype(bf16), w4bc_ref[...], preferred_element_type=f32)
              + b4_ref[...])                              # [TN, Sp], lanes >= S are 0

    s_ref[...] = s_full
    wid_ref[...] = w_id

    # ---- per-tile partial loss sums (finished in the wrapper) -------------
    row = jax.lax.broadcasted_iota(jnp.int32, (TN, 1), 0) + pl.program_id(0) * TN
    valid = (row < n_valid).astype(f32)                   # mask padded rows

    # KL(w || softmax(prior_z)): lane-dense full-row reduction.
    kl_row = jnp.sum(w * (log_w - lp_ref[...]), axis=1, keepdims=True)  # [TN, 1]
    kl_part = jnp.sum(kl_row * valid, keepdims=True).reshape(1, 1)

    # cross-entropy term: -softmax(s) * log(softmax(x))  (reference's form)
    s_act = s_full[:, :S]
    smax = jnp.max(s_act, axis=1, keepdims=True)
    es = jnp.exp(s_act - smax)
    gen = es / jnp.sum(es, axis=1, keepdims=True)
    xmax = jnp.max(x, axis=1, keepdims=True)
    log_tgt = (x - xmax) - jnp.log(jnp.sum(jnp.exp(x - xmax), axis=1, keepdims=True))
    ce_row = jnp.sum(-gen * log_tgt, axis=1, keepdims=True)             # [TN, 1]
    ce_part = jnp.sum(ce_row * valid, keepdims=True).reshape(1, 1)

    # write partials into a fully (8,128)-aligned block: [0,0]=kl, [0,1]=ce.
    rr = jax.lax.broadcasted_iota(jnp.int32, (8, 128), 0)
    cc = jax.lax.broadcasted_iota(jnp.int32, (8, 128), 1)
    loss_ref[...] = jnp.where((rr == 0) & (cc == 0), kl_part,
                              jnp.where((rr == 0) & (cc == 1), ce_part, 0.0))


def init_params(key, sent_size, M, K):
    k1, k2, k3, k4, k5, k6 = jax.random.split(key, 6)
    scale = 0.1
    return {
        # linear weights stored as [in_features, out_features]
        "w1": scale * jax.random.normal(k1, (sent_size, K * M), jnp.float32),
        "b1": scale * jax.random.normal(k2, (1, K * M), jnp.float32),
        "w2": scale * jax.random.normal(k3, (M, sent_size * 2), jnp.float32),
        "w3": scale * jax.random.normal(k4, (M, sent_size * 2), jnp.float32),
        "w4": scale * jax.random.normal(k5, (sent_size * 4, sent_size), jnp.float32),
        "b4": scale * jax.random.normal(k6, (1, sent_size), jnp.float32),
        "prior_z": jnp.ones((M, K), jnp.float32) / K,
    }


def _round_up(a, b):
    return (a + b - 1) // b * b


def _vmem_limit_bytes(tn, S, M, K, Sp):
    MK = M * K
    stream_in = 2 * 4 * tn * (2 * S + MK)                        # x|xp + gumbel, dbl-buf
    stream_out = 2 * 4 * (tn * Sp + tn * M + 8 * 128)            # s, w_id, partials
    weights = 2 * 2 * (S * MK + MK * MK + M * 4 * S + 2 * 2 * S * Sp)  # bf16, dbl-buf
    weights += 2 * 4 * (2 * MK + Sp)                             # f32 biases + log prior
    temps = 20 * 4 * tn * MK                                     # conservative intermediates
    return int(stream_in + stream_out + weights + temps + (4 << 20))


@functools.partial(jax.jit,
                   static_argnames=("M", "K", "temperature", "alpha", "block_rows"))
def dvae_forward(x, adjacency_list, params, noise_key,
                 *, M, K, temperature, alpha, block_rows=512):
    N, S = x.shape
    MK = M * K
    Sp = _round_up(S, 128)
    f32, bf16 = jnp.float32, jnp.bfloat16

    # --- glue: parent gather, signal concat, gumbel noise -------------------
    parent_index = adjacency_list[:, 0]
    x_parent = x[parent_index]
    xxp = jnp.concatenate([x, x_parent], axis=1)                  # [N, 2S]
    u = jax.random.uniform(noise_key, (N, MK), jnp.float32)
    gum = -jnp.log(-jnp.log(u + EPS) + EPS) * (1.0 / 300.0)       # [N, MK]

    # --- parameter prep (once per call) --------------------------------------
    w1t = params["w1"].astype(bf16)                               # [S, MK]
    b1 = params["b1"].reshape(1, MK).astype(f32)
    w234 = jnp.concatenate([params["w2"], params["w3"]], axis=1).astype(bf16)  # [M, 4S]
    w4 = params["w4"]                                             # [4S, S]
    w4a = jnp.pad(w4[:2 * S], ((0, 0), (0, Sp - S))).astype(bf16)   # [2S, Sp]
    w4bc = jnp.pad(w4[2 * S:], ((0, 0), (0, Sp - S))).astype(bf16)  # [2S, Sp]
    b4 = jnp.pad(params["b4"].reshape(1, S), ((0, 0), (0, Sp - S))).astype(f32)
    log_prior = jnp.log(jax.nn.softmax(params["prior_z"], axis=1) + EPS
                        ).reshape(1, MK).astype(f32)
    gidx = jnp.arange(MK) // K                                    # block-diag group-ones
    gones = (gidx[:, None] == gidx[None, :]).astype(bf16)         # [MK, MK], 0/1

    # --- row tiling: >= 2 tiles when possible (v7x megacore) ----------------
    tn = max(8, min(block_rows, _round_up(-(-N // 2), 8)))
    Np = _round_up(N, tn)
    if Np != N:
        pad = Np - N
        xxp = jnp.pad(xxp, ((0, pad), (0, 0)))
        gum = jnp.pad(gum, ((0, pad), (0, 0)))
    num_tiles = Np // tn

    kernel = functools.partial(_dvae_kernel, S=S, M=M, K=K,
                               temperature=temperature, n_valid=N)

    row_map = lambda i: (i, 0)
    rep_map = lambda i: (0, 0)

    flops = 2 * N * (S * MK + 2 * MK * MK + M * 4 * S + 2 * 2 * S * Sp)
    transcendentals = N * (5 * MK + 4 * S)
    bytes_accessed = 4 * N * (2 * S + MK + Sp + M) + 2 * (S * MK + MK * MK + 6 * M * S)

    s_pad, wid_pad, partials = pl.pallas_call(
        kernel,
        out_shape=(
            jax.ShapeDtypeStruct((Np, Sp), jnp.float32),
            jax.ShapeDtypeStruct((Np, M), jnp.float32),
            jax.ShapeDtypeStruct((num_tiles * 8, 128), jnp.float32),
        ),
        grid=(num_tiles,),
        in_specs=[
            pl.BlockSpec((tn, 2 * S), row_map),      # x | x_parent
            pl.BlockSpec((tn, MK), row_map),         # gumbel noise
            pl.BlockSpec((S, MK), rep_map),          # w1
            pl.BlockSpec((1, MK), rep_map),          # b1
            pl.BlockSpec((MK, MK), rep_map),         # group-ones (bf16)
            pl.BlockSpec((M, 4 * S), rep_map),       # fused [w2 | w3]
            pl.BlockSpec((2 * S, Sp), rep_map),      # w4 (interaction rows, padded)
            pl.BlockSpec((2 * S, Sp), rep_map),      # w4 (context rows, padded)
            pl.BlockSpec((1, Sp), rep_map),          # b4 (padded)
            pl.BlockSpec((1, MK), rep_map),          # log prior (flattened)
        ],
        out_specs=(
            pl.BlockSpec((tn, Sp), row_map),         # s (lane-dense, padded)
            pl.BlockSpec((tn, M), row_map),          # w_id
            pl.BlockSpec((8, 128), row_map),         # per-tile (kl, ce) partials
        ),
        compiler_params=pltpu.CompilerParams(
            dimension_semantics=("parallel",),
            vmem_limit_bytes=_vmem_limit_bytes(tn, S, M, K, Sp),
        ),
        cost_estimate=pl.CostEstimate(
            flops=int(flops),
            transcendentals=int(transcendentals),
            bytes_accessed=int(bytes_accessed),
        ),
    )(xxp, gum, w1t, b1, gones, w234, w4a, w4bc, b4, log_prior)

    # --- finish the reductions in the wrapper -------------------------------
    kl = jnp.sum(partials[:, 0]) / N
    re = jnp.sum(partials[:, 1]) / (N * S)
    loss_vae = jnp.abs(re - alpha * kl)

    s_out = s_pad[:N, :S]
    z = wid_pad[:N]
    return s_out, (loss_vae, re, kl), z


if __name__ == "__main__":
    # small shapes consistent with the module
    N = 8            # number of nodes / batch
    SENT_SIZE = 32
    M = 8
    K = 16
    TEMPERATURE = 0.7
    ALPHA = 0.1

    root = jax.random.PRNGKey(0)
    k_param, k_x, k_noise = jax.random.split(root, 3)

    params = init_params(k_param, SENT_SIZE, M, K)
    x = jax.random.normal(k_x, (N, SENT_SIZE), jnp.float32)
    # adjacency_list[:, 0] is the parent index of each node
    adjacency_list = jnp.stack(
        [(jnp.arange(N) + 1) % N, jnp.arange(N)], axis=1).astype(jnp.int32)

    s, loss_list, z = dvae_forward(
        x, adjacency_list, params, k_noise,
        M=M, K=K, temperature=TEMPERATURE, alpha=ALPHA)

    jax.block_until_ready(s)
    jax.block_until_ready(z)
    jax.block_until_ready(loss_list[0])

    assert s.shape == (N, SENT_SIZE)
    assert z.shape == (N, M)
    assert bool(jnp.all(jnp.isfinite(s)))
    assert bool(jnp.isfinite(loss_list[0]))
    assert bool(jnp.isfinite(loss_list[1])) and bool(jnp.isfinite(loss_list[2]))
    assert bool(jnp.all(z >= 1.0)) and bool(jnp.all(z <= K))
    print("KERNEL_OK")
</pallas_src>

<mosaic_0001>
module attributes {stable_mosaic.version = 11 : i64} {
  func.func @_dvae_kernel(%arg0: i32, %arg1: memref<8x64xf32, #tpu.memory_space<vmem>>, %arg2: memref<8x128xf32, #tpu.memory_space<vmem>>, %arg3: memref<32x128xbf16, #tpu.memory_space<vmem>>, %arg4: memref<1x128xf32, #tpu.memory_space<vmem>>, %arg5: memref<128x128xbf16, #tpu.memory_space<vmem>>, %arg6: memref<8x128xbf16, #tpu.memory_space<vmem>>, %arg7: memref<64x128xbf16, #tpu.memory_space<vmem>>, %arg8: memref<64x128xbf16, #tpu.memory_space<vmem>>, %arg9: memref<1x128xf32, #tpu.memory_space<vmem>>, %arg10: memref<1x128xf32, #tpu.memory_space<vmem>>, %arg11: memref<8x128xf32, #tpu.memory_space<vmem>>, %arg12: memref<8x8xf32, #tpu.memory_space<vmem>>, %arg13: memref<8x128xf32, #tpu.memory_space<vmem>>) attributes {dimension_semantics = [#tpu.dimension_semantics<parallel>], iteration_bounds = array<i64: 1>, scalar_prefetch = 0 : i64, scratch_operands = 0 : i64, tpu.core_type = #tpu.core_type<tc>, window_params = [{transform_indices = @transform_0, window_bounds = array<i64: 8, 64>}, {transform_indices = @transform_1, window_bounds = array<i64: 8, 128>}, {pipeline_mode = #tpu.pipeline_mode<synchronous>, transform_indices = @transform_2, window_bounds = array<i64: 32, 128>}, {pipeline_mode = #tpu.pipeline_mode<synchronous>, transform_indices = @transform_3, window_bounds = array<i64: 1, 128>}, {pipeline_mode = #tpu.pipeline_mode<synchronous>, transform_indices = @transform_4, window_bounds = array<i64: 128, 128>}, {pipeline_mode = #tpu.pipeline_mode<synchronous>, transform_indices = @transform_5, window_bounds = array<i64: 8, 128>}, {pipeline_mode = #tpu.pipeline_mode<synchronous>, transform_indices = @transform_6, window_bounds = array<i64: 64, 128>}, {pipeline_mode = #tpu.pipeline_mode<synchronous>, transform_indices = @transform_7, window_bounds = array<i64: 64, 128>}, {pipeline_mode = #tpu.pipeline_mode<synchronous>, transform_indices = @transform_8, window_bounds = array<i64: 1, 128>}, {pipeline_mode = #tpu.pipeline_mode<synchronous>, transform_indices = @transform_9, window_bounds = array<i64: 1, 128>}, {transform_indices = @transform_10, window_bounds = array<i64: 8, 128>}, {transform_indices = @transform_11, window_bounds = array<i64: 8, 8>}, {transform_indices = @transform_12, window_bounds = array<i64: 8, 128>}]} {
    %c0 = arith.constant 0 : index
    %c0_0 = arith.constant 0 : index
    %0 = vector.load %arg1[%c0, %c0_0] : memref<8x64xf32, #tpu.memory_space<vmem>>, vector<8x64xf32>
    %1 = vector.extract_strided_slice %0 {offsets = [0, 0], sizes = [8, 32], strides = [1, 1]} : vector<8x64xf32> to vector<8x32xf32>
    %2 = arith.truncf %1 : vector<8x32xf32> to vector<8x32xbf16>
    %c0_1 = arith.constant 0 : index
    %c0_2 = arith.constant 0 : index
    %3 = vector.load %arg3[%c0_1, %c0_2] : memref<32x128xbf16, #tpu.memory_space<vmem>>, vector<32x128xbf16>
    %cst = arith.constant dense<0.000000e+00> : vector<8x128xf32>
    %4 = tpu.matmul %2, %3, %cst {dimension_numbers = #tpu.dot_dimension_numbers<[1], [0], [0], [1], [0, 0, 1, 1], [], []>} : vector<8x32xbf16>, vector<32x128xbf16>, vector<8x128xf32> -> vector<8x128xf32>
    %c0_3 = arith.constant 0 : index
    %c0_4 = arith.constant 0 : index
    %5 = vector.load %arg4[%c0_3, %c0_4] : memref<1x128xf32, #tpu.memory_space<vmem>>, vector<1x128xf32>
    %6 = vector.broadcast %5 : vector<1x128xf32> to vector<8x128xf32>
    %7 = arith.addf %4, %6 : vector<8x128xf32>
    %8 = math.tanh %7 : vector<8x128xf32>
    %9 = math.exp %8 : vector<8x128xf32>
    %10 = arith.truncf %9 : vector<8x128xf32> to vector<8x128xbf16>
    %c0_5 = arith.constant 0 : index
    %c0_6 = arith.constant 0 : index
    %11 = vector.load %arg5[%c0_5, %c0_6] : memref<128x128xbf16, #tpu.memory_space<vmem>>, vector<128x128xbf16>
    %cst_7 = arith.constant dense<0.000000e+00> : vector<8x128xf32>
    %12 = tpu.matmul %10, %11, %cst_7 {dimension_numbers = #tpu.dot_dimension_numbers<[1], [0], [0], [1], [0, 0, 1, 1], [], []>} : vector<8x128xbf16>, vector<128x128xbf16>, vector<8x128xf32> -> vector<8x128xf32>
    %13 = math.log %12 : vector<8x128xf32>
    %14 = arith.subf %8, %13 : vector<8x128xf32>
    %c0_8 = arith.constant 0 : index
    %c0_9 = arith.constant 0 : index
    %15 = vector.load %arg2[%c0_8, %c0_9] : memref<8x128xf32, #tpu.memory_space<vmem>>, vector<8x128xf32>
    %16 = arith.addf %14, %15 : vector<8x128xf32>
    %cst_10 = arith.constant 1.42857146 : f32
    %17 = vector.broadcast %cst_10 : f32 to vector<8x128xf32>
    %18 = arith.mulf %16, %17 : vector<8x128xf32>
    %19 = math.exp %18 : vector<8x128xf32>
    %20 = arith.truncf %19 : vector<8x128xf32> to vector<8x128xbf16>
    %c0_11 = arith.constant 0 : index
    %c0_12 = arith.constant 0 : index
    %21 = vector.load %arg5[%c0_11, %c0_12] : memref<128x128xbf16, #tpu.memory_space<vmem>>, vector<128x128xbf16>
    %cst_13 = arith.constant dense<0.000000e+00> : vector<8x128xf32>
    %22 = tpu.matmul %20, %21, %cst_13 {dimension_numbers = #tpu.dot_dimension_numbers<[1], [0], [0], [1], [0, 0, 1, 1], [], []>} : vector<8x128xbf16>, vector<128x128xbf16>, vector<8x128xf32> -> vector<8x128xf32>
    %23 = arith.divf %19, %22 : vector<8x128xf32>
    %24 = math.log %22 : vector<8x128xf32>
    %25 = arith.subf %18, %24 : vector<8x128xf32>
    %26 = vector.shape_cast %18 : vector<8x128xf32> to vector<8x8x16xf32>
    %cst_14 = arith.constant dense<0xFF800000> : vector<8x8xf32>
    %27 = vector.multi_reduction <maximumf>, %26, %cst_14 [2] : vector<8x8x16xf32> to vector<8x8xf32>
    %28 = vector.shape_cast %27 : vector<8x8xf32> to vector<8x8x1xf32>
    %29 = tpu.iota {dimensions = array<i32: 2>} : vector<8x8x16xi32>
    %30 = vector.broadcast %28 : vector<8x8x1xf32> to vector<8x8x16xf32>
    %31 = arith.cmpf oge, %26, %30 : vector<8x8x16xf32>
    %c16_i32 = arith.constant 16 : i32
    %32 = vector.broadcast %c16_i32 : i32 to vector<8x8x16xi32>
    %33 = arith.select %31, %29, %32 : vector<8x8x16xi1>, vector<8x8x16xi32>
    %cst_15 = arith.constant dense<2147483647> : vector<8x8xi32>
    %34 = vector.multi_reduction <minsi>, %33, %cst_15 [2] : vector<8x8x16xi32> to vector<8x8xi32>
    %35 = arith.sitofp %34 : vector<8x8xi32> to vector<8x8xf32>
    %cst_16 = arith.constant 1.000000e+00 : f32
    %36 = vector.broadcast %cst_16 : f32 to vector<8x8xf32>
    %37 = arith.addf %35, %36 : vector<8x8xf32>
    %38 = arith.truncf %37 : vector<8x8xf32> to vector<8x8xbf16>
    %c0_17 = arith.constant 0 : index
    %c0_18 = arith.constant 0 : index
    %39 = vector.load %arg6[%c0_17, %c0_18] : memref<8x128xbf16, #tpu.memory_space<vmem>>, vector<8x128xbf16>
    %cst_19 = arith.constant dense<0.000000e+00> : vector<8x128xf32>
    %40 = tpu.matmul %38, %39, %cst_19 {dimension_numbers = #tpu.dot_dimension_numbers<[1], [0], [0], [1], [0, 0, 1, 1], [], []>} : vector<8x8xbf16>, vector<8x128xbf16>, vector<8x128xf32> -> vector<8x128xf32>
    %41 = vector.extract_strided_slice %40 {offsets = [0, 0], sizes = [8, 64], strides = [1, 1]} : vector<8x128xf32> to vector<8x64xf32>
    %cst_20 = arith.constant 0.00333333341 : f32
    %42 = vector.broadcast %cst_20 : f32 to vector<8x64xf32>
    %43 = arith.mulf %41, %42 : vector<8x64xf32>
    %44 = vector.extract_strided_slice %40 {offsets = [0, 64], sizes = [8, 64], strides = [1, 1]} : vector<8x128xf32> to vector<8x64xf32>
    %45 = arith.negf %44 : vector<8x64xf32>
    %46 = math.exp %45 : vector<8x64xf32>
    %cst_21 = arith.constant 1.000000e+00 : f32
    %47 = vector.broadcast %cst_21 : f32 to vector<8x64xf32>
    %48 = arith.addf %47, %46 : vector<8x64xf32>
    %49 = arith.divf %47, %48 : vector<8x64xf32>
    %50 = arith.mulf %49, %0 : vector<8x64xf32>
    %51 = arith.truncf %43 : vector<8x64xf32> to vector<8x64xbf16>
    %c0_22 = arith.constant 0 : index
    %c0_23 = arith.constant 0 : index
    %52 = vector.load %arg7[%c0_22, %c0_23] : memref<64x128xbf16, #tpu.memory_space<vmem>>, vector<64x128xbf16>
    %cst_24 = arith.constant dense<0.000000e+00> : vector<8x128xf32>
    %53 = tpu.matmul %51, %52, %cst_24 {dimension_numbers = #tpu.dot_dimension_numbers<[1], [0], [0], [1], [0, 0, 1, 1], [], []>} : vector<8x64xbf16>, vector<64x128xbf16>, vector<8x128xf32> -> vector<8x128xf32>
    %54 = arith.truncf %50 : vector<8x64xf32> to vector<8x64xbf16>
    %c0_25 = arith.constant 0 : index
    %c0_26 = arith.constant 0 : index
    %55 = vector.load %arg8[%c0_25, %c0_26] : memref<64x128xbf16, #tpu.memory_space<vmem>>, vector<64x128xbf16>
    %cst_27 = arith.constant dense<0.000000e+00> : vector<8x128xf32>
    %56 = tpu.matmul %54, %55, %cst_27 {dimension_numbers = #tpu.dot_dimension_numbers<[1], [0], [0], [1], [0, 0, 1, 1], [], []>} : vector<8x64xbf16>, vector<64x128xbf16>, vector<8x128xf32> -> vector<8x128xf32>
    %57 = arith.addf %53, %56 : vector<8x128xf32>
    %c0_28 = arith.constant 0 : index
    %c0_29 = arith.constant 0 : index
    %58 = vector.load %arg9[%c0_28, %c0_29] : memref<1x128xf32, #tpu.memory_space<vmem>>, vector<1x128xf32>
    %59 = vector.broadcast %58 : vector<1x128xf32> to vector<8x128xf32>
    %60 = arith.addf %57, %59 : vector<8x128xf32>
    %c0_30 = arith.constant 0 : index
    %c0_31 = arith.constant 0 : index
    %61 = vector.load %arg11[%c0_30, %c0_31] : memref<8x128xf32, #tpu.memory_space<vmem>>, vector<8x128xf32>
    tpu.vector_store %arg11[%c0_30, %c0_31], %60 {strides = array<i32>} : memref<8x128xf32, #tpu.memory_space<vmem>>, vector<8x128xf32>,
    %c0_32 = arith.constant 0 : index
    %c0_33 = arith.constant 0 : index
    %62 = vector.load %arg12[%c0_32, %c0_33] : memref<8x8xf32, #tpu.memory_space<vmem>>, vector<8x8xf32>
    tpu.vector_store %arg12[%c0_32, %c0_33], %37 {strides = array<i32>} : memref<8x8xf32, #tpu.memory_space<vmem>>, vector<8x8xf32>,
    %63 = tpu.iota {dimensions = array<i32: 0>} : vector<8x1xi32>
    %c8_i32 = arith.constant 8 : i32
    %64 = arith.muli %arg0, %c8_i32 : i32
    %65 = vector.broadcast %64 : i32 to vector<8x1xi32>
    %66 = arith.addi %63, %65 : vector<8x1xi32>
    %c8_i32_34 = arith.constant 8 : i32
    %67 = vector.broadcast %c8_i32_34 : i32 to vector<8x1xi32>
    %68 = arith.cmpi slt, %66, %67 : vector<8x1xi32>
    %69 = arith.extui %68 : vector<8x1xi1> to vector<8x1xi32>
    %70 = arith.sitofp %69 : vector<8x1xi32> to vector<8x1xf32>
    %c0_35 = arith.constant 0 : index
    %c0_36 = arith.constant 0 : index
    %71 = vector.load %arg10[%c0_35, %c0_36] : memref<1x128xf32, #tpu.memory_space<vmem>>, vector<1x128xf32>
    %72 = vector.broadcast %71 : vector<1x128xf32> to vector<8x128xf32>
    %73 = arith.subf %25, %72 : vector<8x128xf32>
    %74 = arith.mulf %23, %73 : vector<8x128xf32>
    %cst_37 = arith.constant dense<0.000000e+00> : vector<8xf32>
    %75 = vector.multi_reduction <add>, %74, %cst_37 [1] : vector<8x128xf32> to vector<8xf32>
    %76 = vector.shape_cast %75 : vector<8xf32> to vector<8x1xf32>
    %77 = arith.mulf %76, %70 : vector<8x1xf32>
    %78 = vector.shape_cast %77 : vector<8x1xf32> to vector<1x8x1xf32>
    %cst_38 = arith.constant dense<0.000000e+00> : vector<1xf32>
    %79 = vector.multi_reduction <add>, %78, %cst_38 [1, 2] : vector<1x8x1xf32> to vector<1xf32>
    %80 = vector.shape_cast %79 : vector<1xf32> to vector<1x1x1xf32>
    %81 = vector.extract %80[0, 0, 0] : f32 from vector<1x1x1xf32>
    %82 = vector.broadcast %81 : f32 to vector<1x1xf32>
    %83 = vector.extract_strided_slice %60 {offsets = [0, 0], sizes = [8, 32], strides = [1, 1]} : vector<8x128xf32> to vector<8x32xf32>
    %cst_39 = arith.constant dense<0xFF800000> : vector<8xf32>
    %84 = vector.multi_reduction <maximumf>, %83, %cst_39 [1] : vector<8x32xf32> to vector<8xf32>
    %85 = vector.shape_cast %84 : vector<8xf32> to vector<8x1xf32>
    %86 = vector.broadcast %85 : vector<8x1xf32> to vector<8x32xf32>
    %87 = arith.subf %83, %86 : vector<8x32xf32>
    %88 = math.exp %87 : vector<8x32xf32>
    %cst_40 = arith.constant dense<0.000000e+00> : vector<8xf32>
    %89 = vector.multi_reduction <add>, %88, %cst_40 [1] : vector<8x32xf32> to vector<8xf32>
    %90 = vector.shape_cast %89 : vector<8xf32> to vector<8x1xf32>
    %91 = vector.broadcast %90 : vector<8x1xf32> to vector<8x32xf32>
    %92 = arith.divf %88, %91 : vector<8x32xf32>
    %cst_41 = arith.constant dense<0xFF800000> : vector<8xf32>
    %93 = vector.multi_reduction <maximumf>, %1, %cst_41 [1] : vector<8x32xf32> to vector<8xf32>
    %94 = vector.shape_cast %93 : vector<8xf32> to vector<8x1xf32>
    %95 = vector.broadcast %94 : vector<8x1xf32> to vector<8x32xf32>
    %96 = arith.subf %1, %95 : vector<8x32xf32>
    %97 = vector.broadcast %94 : vector<8x1xf32> to vector<8x32xf32>
    %98 = arith.subf %1, %97 : vector<8x32xf32>
    %99 = math.exp %98 : vector<8x32xf32>
    %cst_42 = arith.constant dense<0.000000e+00> : vector<8xf32>
    %100 = vector.multi_reduction <add>, %99, %cst_42 [1] : vector<8x32xf32> to vector<8xf32>
    %101 = vector.shape_cast %100 : vector<8xf32> to vector<8x1xf32>
    %102 = math.log %101 : vector<8x1xf32>
    %103 = vector.broadcast %102 : vector<8x1xf32> to vector<8x32xf32>
    %104 = arith.subf %96, %103 : vector<8x32xf32>
    %cst_43 = arith.constant 0.000000e+00 : f32
    %105 = vector.broadcast %cst_43 : f32 to vector<8x32xf32>
    %106 = arith.subf %105, %92 : vector<8x32xf32>
    %107 = arith.mulf %106, %104 : vector<8x32xf32>
    %cst_44 = arith.constant dense<0.000000e+00> : vector<8xf32>
    %108 = vector.multi_reduction <add>, %107, %cst_44 [1] : vector<8x32xf32> to vector<8xf32>
    %109 = vector.shape_cast %108 : vector<8xf32> to vector<8x1xf32>
    %110 = arith.mulf %109, %70 : vector<8x1xf32>
    %111 = vector.shape_cast %110 : vector<8x1xf32> to vector<1x8x1xf32>
    %cst_45 = arith.constant dense<0.000000e+00> : vector<1xf32>
    %112 = vector.multi_reduction <add>, %111, %cst_45 [1, 2] : vector<1x8x1xf32> to vector<1xf32>
    %113 = vector.shape_cast %112 : vector<1xf32> to vector<1x1x1xf32>
    %114 = vector.extract %113[0, 0, 0] : f32 from vector<1x1x1xf32>
    %115 = vector.broadcast %114 : f32 to vector<1x1xf32>
    %116 = tpu.iota {dimensions = array<i32: 0>} : vector<8x128xi32>
    %117 = tpu.iota {dimensions = array<i32: 1>} : vector<8x128xi32>
    %c0_i32 = arith.constant 0 : i32
    %118 = vector.broadcast %c0_i32 : i32 to vector<8x128xi32>
    %119 = arith.cmpi eq, %116, %118 : vector<8x128xi32>
    %c0_i32_46 = arith.constant 0 : i32
    %120 = vector.broadcast %c0_i32_46 : i32 to vector<8x128xi32>
    %121 = arith.cmpi eq, %117, %120 : vector<8x128xi32>
    %122 = arith.andi %119, %121 : vector<8x128xi1>
    %c0_i32_47 = arith.constant 0 : i32
    %123 = vector.broadcast %c0_i32_47 : i32 to vector<8x128xi32>
    %124 = arith.cmpi eq, %116, %123 : vector<8x128xi32>
    %c1_i32 = arith.constant 1 : i32
    %125 = vector.broadcast %c1_i32 : i32 to vector<8x128xi32>
    %126 = arith.cmpi eq, %117, %125 : vector<8x128xi32>
    %127 = arith.andi %124, %126 : vector<8x128xi1>
    %cst_48 = arith.constant 0.000000e+00 : f32
    %128 = vector.shape_cast %115 : vector<1x1xf32> to vector<1x1xf32>
    %129 = vector.broadcast %128 : vector<1x1xf32> to vector<8x128xf32>
    %130 = vector.broadcast %cst_48 : f32 to vector<8x128xf32>
    %131 = arith.select %127, %129, %130 : vector<8x128xi1>, vector<8x128xf32>
    %132 = vector.shape_cast %82 : vector<1x1xf32> to vector<1x1xf32>
    %133 = vector.broadcast %132 : vector<1x1xf32> to vector<8x128xf32>
    %134 = arith.select %122, %133, %131 : vector<8x128xi1>, vector<8x128xf32>
    %c0_49 = arith.constant 0 : index
    %c0_50 = arith.constant 0 : index
    %135 = vector.load %arg13[%c0_49, %c0_50] : memref<8x128xf32, #tpu.memory_space<vmem>>, vector<8x128xf32>
    tpu.vector_store %arg13[%c0_49, %c0_50], %134 {strides = array<i32>} : memref<8x128xf32, #tpu.memory_space<vmem>>, vector<8x128xf32>,
    return
  }
  func.func @transform_0(%arg0: i32) -> (i32, i32) {
    %c0_i32 = arith.constant 0 : i32
    %c0_i32_0 = arith.constant 0 : i32
    return %arg0, %c0_i32 : i32, i32
  }
  func.func @transform_1(%arg0: i32) -> (i32, i32) {
    %c0_i32 = arith.constant 0 : i32
    %c0_i32_0 = arith.constant 0 : i32
    return %arg0, %c0_i32 : i32, i32
  }
  func.func @transform_2(%arg0: i32) -> (i32, i32) {
    %c0_i32 = arith.constant 0 : i32
    %c0_i32_0 = arith.constant 0 : i32
    %c0_i32_1 = arith.constant 0 : i32
    return %c0_i32, %c0_i32_0 : i32, i32
  }
  func.func @transform_3(%arg0: i32) -> (i32, i32) {
    %c0_i32 = arith.constant 0 : i32
    %c0_i32_0 = arith.constant 0 : i32
    %c0_i32_1 = arith.constant 0 : i32
    return %c0_i32, %c0_i32_0 : i32, i32
  }
  func.func @transform_4(%arg0: i32) -> (i32, i32) {
    %c0_i32 = arith.constant 0 : i32
    %c0_i32_0 = arith.constant 0 : i32
    %c0_i32_1 = arith.constant 0 : i32
    return %c0_i32, %c0_i32_0 : i32, i32
  }
  func.func @transform_5(%arg0: i32) -> (i32, i32) {
    %c0_i32 = arith.constant 0 : i32
    %c0_i32_0 = arith.constant 0 : i32
    %c0_i32_1 = arith.constant 0 : i32
    return %c0_i32, %c0_i32_0 : i32, i32
  }
  func.func @transform_6(%arg0: i32) -> (i32, i32) {
    %c0_i32 = arith.constant 0 : i32
    %c0_i32_0 = arith.constant 0 : i32
    %c0_i32_1 = arith.constant 0 : i32
    return %c0_i32, %c0_i32_0 : i32, i32
  }
  func.func @transform_7(%arg0: i32) -> (i32, i32) {
    %c0_i32 = arith.constant 0 : i32
    %c0_i32_0 = arith.constant 0 : i32
    %c0_i32_1 = arith.constant 0 : i32
    return %c0_i32, %c0_i32_0 : i32, i32
  }
  func.func @transform_8(%arg0: i32) -> (i32, i32) {
    %c0_i32 = arith.constant 0 : i32
    %c0_i32_0 = arith.constant 0 : i32
    %c0_i32_1 = arith.constant 0 : i32
    return %c0_i32, %c0_i32_0 : i32, i32
  }
  func.func @transform_9(%arg0: i32) -> (i32, i32) {
    %c0_i32 = arith.constant 0 : i32
    %c0_i32_0 = arith.constant 0 : i32
    %c0_i32_1 = arith.constant 0 : i32
    return %c0_i32, %c0_i32_0 : i32, i32
  }
  func.func @transform_10(%arg0: i32) -> (i32, i32) {
    %c0_i32 = arith.constant 0 : i32
    %c0_i32_0 = arith.constant 0 : i32
    return %arg0, %c0_i32 : i32, i32
  }
  func.func @transform_11(%arg0: i32) -> (i32, i32) {
    %c0_i32 = arith.constant 0 : i32
    %c0_i32_0 = arith.constant 0 : i32
    return %arg0, %c0_i32 : i32, i32
  }
  func.func @transform_12(%arg0: i32) -> (i32, i32) {
    %c0_i32 = arith.constant 0 : i32
    %c0_i32_0 = arith.constant 0 : i32
    return %arg0, %c0_i32 : i32, i32
  }
}

</mosaic_0001>

<llo_original>
// kernel: dvae_forward.1
$region0: #{dvae_forward.1}
  #allocation0 [shape = 'u32[]', space=smem, size = 0x4, offset = 0x4, fixed_abs, tag = 'smem constant byte address 0x4 - core index']
  #allocation1 [shape = 'u32[144,128]{1,0:T(1,128)}', space=vmem, size = 0x12000, scoped, tag = 'internal scratch']
  %s0 = inlined_call_operand.vmem [shape: f32[8,64], index: 0, kind: input, shape index: {}]
  %s1 = inlined_call_operand.vmem [shape: f32[8,128], index: 1, kind: input, shape index: {}]
  %s2 = inlined_call_operand.vmem [shape: bf16[32,128], index: 2, kind: input, shape index: {}]
  %s3 = inlined_call_operand.vmem [shape: f32[1,128], index: 3, kind: input, shape index: {}]
  %s4 = inlined_call_operand.vmem [shape: bf16[128,128], index: 4, kind: input, shape index: {}]
  %s5 = inlined_call_operand.vmem [shape: bf16[8,128], index: 5, kind: input, shape index: {}]
  %s6 = inlined_call_operand.vmem [shape: bf16[64,128], index: 6, kind: input, shape index: {}]
  %s7 = inlined_call_operand.vmem [shape: bf16[64,128], index: 7, kind: input, shape index: {}]
  %s8 = inlined_call_operand.vmem [shape: f32[1,128], index: 8, kind: input, shape index: {}]
  %s9 = inlined_call_operand.vmem [shape: f32[1,128], index: 9, kind: input, shape index: {}]
  %s10 = inlined_call_operand.hbm [shape: f32[8,128], index: 10, kind: output, shape index: {0}]
  %s11 = inlined_call_operand.hbm [shape: f32[8,8], index: 11, kind: output, shape index: {1}]
  %s12 = inlined_call_operand.vmem [shape: f32[8,128], index: 12, kind: output, shape index: {2}]
  %13 = xla_tuple %s10, %s11, %s12
  %s14 = sld [smem:[#allocation0]]
  $region66: #{dvae_forward.1} parent=0
    _
  %s16 = ssub.s32 1, %s14
  %s17 = scalar_select 0, %s16, %s14
  $region1: #{dvae_forward.1} parent=0
    #allocation2 [shape = 'u8[4096]{0}', space=vmem, size = 0x1000, scoped, tag = 'output window, operand 0, single buffered']
    #allocation3 [shape = 's32[1]{0}', space=sflag, size = 0x4, scoped, tag = 'scoped memory for dvae_forward.1']
    #allocation4 [shape = 'u8[4096]{0}', space=vmem, size = 0x1000, scoped, tag = 'output window, operand 1, single buffered']
    #allocation5 [shape = 's32[1]{0}', space=sflag, size = 0x4, scoped, tag = 'scoped memory for dvae_forward.1']
    %18 = vsyncpa [#allocation3], 0
    %19 = vsyncpa [#allocation5], 0
    // Predicated region
    $region2: #{dvae_forward.1} parent=1 // pred_check
      _
    $region3: #{dvae_forward.1} parent=1 // pred_check_branch
      %21 = sbr.rel (0) target = $region5
    $region4: #{dvae_forward.1} parent=1 // pred_region
      _
    $region5: #{dvae_forward.1} parent=1 // pred_fallthru
      _
    // Predicated region
    $region6: #{dvae_forward.1} parent=1 // pred_check
      _
    $region7: #{dvae_forward.1} parent=1 // pred_check_branch
      %23 = sbr.rel (0) target = $region9
    $region8: #{dvae_forward.1} parent=1 // pred_region
      _
    $region9: #{dvae_forward.1} parent=1 // pred_fallthru
      _
    // Predicated region
    $region10: #{dvae_forward.1} parent=1 // pred_check
      _
    $region11: #{dvae_forward.1} parent=1 // pred_check_branch
      %25 = sbr.rel (0) target = $region13
    $region12: #{dvae_forward.1} parent=1 // pred_region
      _
    $region13: #{dvae_forward.1} parent=1 // pred_fallthru
      _
    // Predicated region
    $region14: #{dvae_forward.1} parent=1 // pred_check
      _
    $region15: #{dvae_forward.1} parent=1 // pred_check_branch
      %27 = sbr.rel (0) target = $region17
    $region16: #{dvae_forward.1} parent=1 // pred_region
      _
    $region17: #{dvae_forward.1} parent=1 // pred_fallthru
      _
    // Predicated region
    $region18: #{dvae_forward.1} parent=1 // pred_check
      _
    $region19: #{dvae_forward.1} parent=1 // pred_check_branch
      %29 = sbr.rel (0) target = $region21
    $region20: #{dvae_forward.1} parent=1 // pred_region
      _
    $region21: #{dvae_forward.1} parent=1 // pred_fallthru
      _
    // Predicated region
    $region22: #{dvae_forward.1} parent=1 // pred_check
      _
    $region23: #{dvae_forward.1} parent=1 // pred_check_branch
      %31 = sbr.rel (0) target = $region25
    $region24: #{dvae_forward.1} parent=1 // pred_region
      _
    $region25: #{dvae_forward.1} parent=1 // pred_fallthru
      _
    // Predicated region
    $region26: #{dvae_forward.1} parent=1 // pred_check
      _
    $region27: #{dvae_forward.1} parent=1 // pred_check_branch
      %33 = sbr.rel (0) target = $region29
    $region28: #{dvae_forward.1} parent=1 // pred_region
      _
    $region29: #{dvae_forward.1} parent=1 // pred_fallthru
      _
    // Predicated region
    $region30: #{dvae_forward.1} parent=1 // pred_check
      _
    $region31: #{dvae_forward.1} parent=1 // pred_check_branch
      %35 = sbr.rel (0) target = $region33
    $region32: #{dvae_forward.1} parent=1 // pred_region
      _
    $region33: #{dvae_forward.1} parent=1 // pred_fallthru
      _
    // Predicated region
    $region34: #{dvae_forward.1} parent=1 // pred_check
      _
    $region35: #{dvae_forward.1} parent=1 // pred_check_branch
      %37 = sbr.rel (0) target = $region37
    $region36: #{dvae_forward.1} parent=1 // pred_region
      _
    $region37: #{dvae_forward.1} parent=1 // pred_fallthru
      _
    // Predicated region
    $region38: #{dvae_forward.1} parent=1 // pred_check
      _
    $region39: #{dvae_forward.1} parent=1 // pred_check_branch
      %39 = sbr.rel (0) target = $region41
    $region40: #{dvae_forward.1} parent=1 // pred_region
      _
    $region41: #{dvae_forward.1} parent=1 // pred_fallthru
      _
    %v41 = vld [vmem:[%s0] sm:$0xff]
    %v42 = vpack.c.bf16 %v41, %v41
    %v43 = vld [vmem:[%s2] sm:$0xf]
    %v44 = vld [vmem:[%s2 + $0x4] sm:$0xf]
    %v45 = vld [vmem:[%s2 + $0x8] sm:$0xf]
    %v46 = vld [vmem:[%s2 + $0xc] sm:$0xf]
    %v47 = vld [vmem:[%s3] sm:$0x1]
    %v49 = vlaneseq
    %v50 = vshrl.u32 %v49, 7
    %v51 = vsub.s32 0, %v50
    %v52 = vrot.slane %v47, %v51
    %v58 = vunpack.c.l.b16 %v43
    %v59 = vunpack.c.l.b16 %v44
    %v60 = vunpack.c.l.b16 %v45
    %v61 = vunpack.c.l.b16 %v46
    %v62 = vpack.c.b16 %v59, %v58
    %v63 = vpack.c.b16 %v61, %v60
    %vm66 = vcmask 261120
    %v68 = vsel %vm66, %v42, 0
    %70 = vmatprep.subr.bf16.mxu0 0
    %71 = vmatpush1.bf16.msra.mxu0 %v62
    %72 = vmatprep.subr.bf16.mxu0 0
    %73 = vmatpush1.bf16.msra.mxu0 %v63
    %74 = vmatprep.subr.bf16.mxu0 0
    %75 = vmatpush1.bf16.msra.mxu0 0
    %76 = vmatprep.subr.bf16.mxu0 0
    %77 = vmatpush1.bf16.msra.mxu0 0
    %78 = vmatprep.subr.bf16.mxu0 0
    %79 = vmatpush1.bf16.msra.mxu0 0
    %80 = vmatprep.subr.bf16.mxu0 0
    %81 = vmatpush1.bf16.msra.mxu0 0
    %82 = vmatprep.subr.bf16.mxu0 0
    %83 = vmatpush1.bf16.msra.mxu0 0
    %84 = vmatprep.subr.bf16.mxu0 0
    %85 = vmatpush1.bf16.msra.mxu0 0
    %86 = vmatprep.subr.bf16.mxu0 0
    %87 = vmatpush1.bf16.msra.mxu0 0
    %88 = vmatprep.subr.bf16.mxu0 0
    %89 = vmatpush1.bf16.msra.mxu0 0
    %90 = vmatprep.subr.bf16.mxu0 0
    %91 = vmatpush1.bf16.msra.mxu0 0
    %92 = vmatprep.subr.bf16.mxu0 0
    %93 = vmatpush1.bf16.msra.mxu0 0
    %94 = vmatprep.subr.bf16.mxu0 0
    %95 = vmatpush1.bf16.msra.mxu0 0
    %96 = vmatprep.subr.bf16.mxu0 0
    %97 = vmatpush1.bf16.msra.mxu0 0
    %98 = vmatprep.subr.bf16.mxu0 0
    %99 = vmatpush1.bf16.msra.mxu0 0
    %100 = vmatprep.subr.bf16.mxu0 0
    %101 = vmatpush1.bf16.msra.mxu0 0
    %102 = vmatprep.mubr.bf16.mxu0 0
    %103 = vmatmul.mubr.bf16.gmra.mrb[0].mxu0 %v68
    %v104 = vpop.f32.mrb[0].mxu0
    %v105 = vadd.f32 %v52, %v104
    %v106 = vpop.f32.mrb[0].mxu0
    %v107 = vpop.f32.mrb[0].mxu0
    %v108 = vpop.f32.mrb[0].mxu0
    %109 = vdwg.mxu0
    %v110 = vtanh.pop %v105
    %v111 = vmul.f32 %v110, 1.442695
    %v112 = vpow.pop %v111
    %v113 = vpack.c.bf16 %v112, %v112
    %v114 = vld [vmem:[%s4] sm:$0xf]
    %v115 = vld [vmem:[%s4 + $0x4] sm:$0xf]
    %v116 = vld [vmem:[%s4 + $0x8] sm:$0xf]
    %v117 = vld [vmem:[%s4 + $0xc] sm:$0xf]
    %v118 = vld [vmem:[%s4 + $0x10] sm:$0xf]
    %v119 = vld [vmem:[%s4 + $0x14] sm:$0xf]
    %v120 = vld [vmem:[%s4 + $0x18] sm:$0xf]
    %v121 = vld [vmem:[%s4 + $0x1c] sm:$0xf]
    %v122 = vld [vmem:[%s4 + $0x20] sm:$0xf]
    %v123 = vld [vmem:[%s4 + $0x24] sm:$0xf]
    %v124 = vld [vmem:[%s4 + $0x28] sm:$0xf]
    %v125 = vld [vmem:[%s4 + $0x2c] sm:$0xf]
    %v126 = vld [vmem:[%s4 + $0x30] sm:$0xf]
    %v127 = vld [vmem:[%s4 + $0x34] sm:$0xf]
    %v128 = vld [vmem:[%s4 + $0x38] sm:$0xf]
    %v129 = vld [vmem:[%s4 + $0x3c] sm:$0xf]
    %v146 = vunpack.c.l.b16 %v114
    %v147 = vunpack.c.l.b16 %v115
    %v148 = vunpack.c.l.b16 %v116
    %v149 = vunpack.c.l.b16 %v117
    %v150 = vunpack.c.l.b16 %v118
    %v151 = vunpack.c.l.b16 %v119
    %v152 = vunpack.c.l.b16 %v120
    %v153 = vunpack.c.l.b16 %v121
    %v154 = vunpack.c.l.b16 %v122
    %v155 = vunpack.c.l.b16 %v123
    %v156 = vunpack.c.l.b16 %v124
    %v157 = vunpack.c.l.b16 %v125
    %v158 = vunpack.c.l.b16 %v126
    %v159 = vunpack.c.l.b16 %v127
    %v160 = vunpack.c.l.b16 %v128
    %v161 = vunpack.c.l.b16 %v129
    %v162 = vpack.c.b16 %v147, %v146
    %v163 = vpack.c.b16 %v149, %v148
    %v164 = vpack.c.b16 %v151, %v150
    %v165 = vpack.c.b16 %v153, %v152
    %v166 = vpack.c.b16 %v155, %v154
    %v167 = vpack.c.b16 %v157, %v156
    %v168 = vpack.c.b16 %v159, %v158
    %v169 = vpack.c.b16 %v161, %v160
    %178 = vmatprep.subr.bf16.mxu0 0
    %179 = vmatpush1.bf16.msra.mxu0 %v162
    %180 = vmatprep.subr.bf16.mxu0 0
    %181 = vmatpush1.bf16.msra.mxu0 %v163
    %182 = vmatprep.subr.bf16.mxu0 0
    %183 = vmatpush1.bf16.msra.mxu0 %v164
    %184 = vmatprep.subr.bf16.mxu0 0
    %185 = vmatpush1.bf16.msra.mxu0 %v165
    %186 = vmatprep.subr.bf16.mxu0 0
    %187 = vmatpush1.bf16.msra.mxu0 %v166
    %188 = vmatprep.subr.bf16.mxu0 0
    %189 = vmatpush1.bf16.msra.mxu0 %v167
    %190 = vmatprep.subr.bf16.mxu0 0
    %191 = vmatpush1.bf16.msra.mxu0 %v168
    %192 = vmatprep.subr.bf16.mxu0 0
    %193 = vmatpush1.bf16.msra.mxu0 %v169
    %194 = vmatprep.subr.bf16.mxu0 0
    %195 = vmatpush1.bf16.msra.mxu0 0
    %196 = vmatprep.subr.bf16.mxu0 0
    %197 = vmatpush1.bf16.msra.mxu0 0
    %198 = vmatprep.subr.bf16.mxu0 0
    %199 = vmatpush1.bf16.msra.mxu0 0
    %200 = vmatprep.subr.bf16.mxu0 0
    %201 = vmatpush1.bf16.msra.mxu0 0
    %202 = vmatprep.subr.bf16.mxu0 0
    %203 = vmatpush1.bf16.msra.mxu0 0
    %204 = vmatprep.subr.bf16.mxu0 0
    %205 = vmatpush1.bf16.msra.mxu0 0
    %206 = vmatprep.subr.bf16.mxu0 0
    %207 = vmatpush1.bf16.msra.mxu0 0
    %208 = vmatprep.subr.bf16.mxu0 0
    %209 = vmatpush1.bf16.msra.mxu0 0
    %210 = vmatprep.mubr.bf16.mxu0 0
    %211 = vmatmul.mubr.bf16.gmra.mrb[0].mxu0 %v113
    %v212 = vpop.f32.mrb[0].mxu0
    %v213 = vadd.f32 0.0, %v212
    %v214 = vpop.f32.mrb[0].mxu0
    %v215 = vpop.f32.mrb[0].mxu0
    %v216 = vpop.f32.mrb[0].mxu0
    %217 = vdwg.mxu0
    %v218 = vlog2.pop %v213
    %v219 = vmul.f32 %v218, 0.6931472
    %v220 = vsub.f32 %v110, %v219
    %v221 = vld [vmem:[%s1] sm:$0xff]
    %v222 = vadd.f32 %v220, %v221
    %v223 = vmul.f32 %v222, 1.4285715
    %v224 = vmul.f32 %v223, 1.442695
    %v225 = vpow.pop %v224
    %v226 = vpack.c.bf16 %v225, %v225
    %227 = vmatprep.subr.bf16.mxu0 0
    %228 = vmatpush1.bf16.msra.mxu0 %v162
    %229 = vmatprep.subr.bf16.mxu0 0
    %230 = vmatpush1.bf16.msra.mxu0 %v163
    %231 = vmatprep.subr.bf16.mxu0 0
    %232 = vmatpush1.bf16.msra.mxu0 %v164
    %233 = vmatprep.subr.bf16.mxu0 0
    %234 = vmatpush1.bf16.msra.mxu0 %v165
    %235 = vmatprep.subr.bf16.mxu0 0
    %236 = vmatpush1.bf16.msra.mxu0 %v166
    %237 = vmatprep.subr.bf16.mxu0 0
    %238 = vmatpush1.bf16.msra.mxu0 %v167
    %239 = vmatprep.subr.bf16.mxu0 0
    %240 = vmatpush1.bf16.msra.mxu0 %v168
    %241 = vmatprep.subr.bf16.mxu0 0
    %242 = vmatpush1.bf16.msra.mxu0 %v169
    %243 = vmatprep.subr.bf16.mxu0 0
    %244 = vmatpush1.bf16.msra.mxu0 0
    %245 = vmatprep.subr.bf16.mxu0 0
    %246 = vmatpush1.bf16.msra.mxu0 0
    %247 = vmatprep.subr.bf16.mxu0 0
    %248 = vmatpush1.bf16.msra.mxu0 0
    %249 = vmatprep.subr.bf16.mxu0 0
    %250 = vmatpush1.bf16.msra.mxu0 0
    %251 = vmatprep.subr.bf16.mxu0 0
    %252 = vmatpush1.bf16.msra.mxu0 0
    %253 = vmatprep.subr.bf16.mxu0 0
    %254 = vmatpush1.bf16.msra.mxu0 0
    %255 = vmatprep.subr.bf16.mxu0 0
    %256 = vmatpush1.bf16.msra.mxu0 0
    %257 = vmatprep.subr.bf16.mxu0 0
    %258 = vmatpush1.bf16.msra.mxu0 0
    %259 = vmatprep.mubr.bf16.mxu0 0
    %260 = vmatmul.mubr.bf16.gmra.mrb[0].mxu0 %v226
    %v261 = vpop.f32.mrb[0].mxu0
    %v262 = vadd.f32 0.0, %v261
    %v263 = vpop.f32.mrb[0].mxu0
    %v264 = vpop.f32.mrb[0].mxu0
    %v265 = vpop.f32.mrb[0].mxu0
    %266 = vdwg.mxu0
    %v267 = vrcp.pop %v262
    %v268 = vmul.f32 %v225, %v267
    %v269 = vlog2.pop %v262
    %v270 = vmul.f32 %v269, 0.6931472
    %v271 = vsub.f32 %v223, %v270
    %273 = vrot.lane.b32.xlu0 %v223, 112
    %v274 = vpop.permute.xlu0 %273
    %276 = vrot.lane.b32.xlu0 %v223, 96
    %v277 = vpop.permute.xlu0 %276
    %279 = vrot.lane.b32.xlu0 %v223, 80
    %v280 = vpop.permute.xlu0 %279
    %282 = vrot.lane.b32.xlu0 %v223, 64
    %v283 = vpop.permute.xlu0 %282
    %285 = vrot.lane.b32.xlu0 %v223, 48
    %v286 = vpop.permute.xlu0 %285
    %288 = vrot.lane.b32.xlu0 %v223, 32
    %v289 = vpop.permute.xlu0 %288
    %291 = vrot.lane.b32.xlu0 %v223, 16
    %v292 = vpop.permute.xlu0 %291
    %v294 = vcombine.low %v223, %v277
    %v295 = vcombine.high %v223, %v277
    %v297 = vunpack.c.l.s4 1983009808
    %v298 = vunpack.c.0.s8 %v297
    %v299 = vlaneseq
    %v300 = vshrl.u32 %v299, 7
    %v301 = vsub.s32 %v298, %v300
    %v302 = vrot.slane %v294, %v301
    %v304 = vunpack.c.l.s4 1983009808
    %v305 = vunpack.c.0.s8 %v304
    %v306 = vlaneseq
    %v307 = vshrl.u32 %v306, 7
    %v308 = vsub.s32 %v305, %v307
    %v309 = vrot.slane %v295, %v308
    %v310 = vcombine.low %v274, %v280
    %v311 = vcombine.high %v274, %v280
    %v313 = vunpack.c.l.s4 1983009808
    %v314 = vunpack.c.0.s8 %v313
    %v315 = vlaneseq
    %v316 = vshrl.u32 %v315, 7
    %v317 = vsub.s32 %v314, %v316
    %v318 = vrot.slane %v310, %v317
    %v320 = vunpack.c.l.s4 1983009808
    %v321 = vunpack.c.0.s8 %v320
    %v322 = vlaneseq
    %v323 = vshrl.u32 %v322, 7
    %v324 = vsub.s32 %v321, %v323
    %v325 = vrot.slane %v311, %v324
    %v326 = vcombine.low %v283, %v289
    %v327 = vcombine.high %v283, %v289
    %v329 = vunpack.c.l.s4 1983009808
    %v330 = vunpack.c.0.s8 %v329
    %v331 = vlaneseq
    %v332 = vshrl.u32 %v331, 7
    %v333 = vsub.s32 %v330, %v332
    %v334 = vrot.slane %v326, %v333
    %v336 = vunpack.c.l.s4 1983009808
    %v337 = vunpack.c.0.s8 %v336
    %v338 = vlaneseq
    %v339 = vshrl.u32 %v338, 7
    %v340 = vsub.s32 %v337, %v339
    %v341 = vrot.slane %v327, %v340
    %v342 = vcombine.low %v286, %v292
    %v343 = vcombine.high %v286, %v292
    %v345 = vunpack.c.l.s4 1983009808
    %v346 = vunpack.c.0.s8 %v345
    %v347 = vlaneseq
    %v348 = vshrl.u32 %v347, 7
    %v349 = vsub.s32 %v346, %v348
    %v350 = vrot.slane %v342, %v349
    %v352 = vunpack.c.l.s4 1983009808
    %v353 = vunpack.c.0.s8 %v352
    %v354 = vlaneseq
    %v355 = vshrl.u32 %v354, 7
    %v356 = vsub.s32 %v353, %v355
    %v357 = vrot.slane %v343, %v356
    %v358 = vcombine.low %v302, %v318
    %v359 = vcombine.high %v302, %v318
    %v361 = vunpack.c.l.s4 1934713408
    %v362 = vunpack.c.0.s8 %v361
    %v363 = vlaneseq
    %v364 = vshrl.u32 %v363, 7
    %v365 = vsub.s32 %v362, %v364
    %v366 = vrot.slane %v358, %v365
    %v368 = vunpack.c.l.s4 1934713408
    %v369 = vunpack.c.0.s8 %v368
    %v370 = vlaneseq
    %v371 = vshrl.u32 %v370, 7
    %v372 = vsub.s32 %v369, %v371
    %v373 = vrot.slane %v359, %v372
    %v374 = vcombine.low %v309, %v325
    %v375 = vcombine.high %v309, %v325
    %v377 = vunpack.c.l.s4 1934713408
    %v378 = vunpack.c.0.s8 %v377
    %v379 = vlaneseq
    %v380 = vshrl.u32 %v379, 7
    %v381 = vsub.s32 %v378, %v380
    %v382 = vrot.slane %v374, %v381
    %v384 = vunpack.c.l.s4 1934713408
    %v385 = vunpack.c.0.s8 %v384
    %v386 = vlaneseq
    %v387 = vshrl.u32 %v386, 7
    %v388 = vsub.s32 %v385, %v387
    %v389 = vrot.slane %v375, %v388
    %v390 = vcombine.low %v334, %v350
    %v391 = vcombine.high %v334, %v350
    %v393 = vunpack.c.l.s4 1934713408
    %v394 = vunpack.c.0.s8 %v393
    %v395 = vlaneseq
    %v396 = vshrl.u32 %v395, 7
    %v397 = vsub.s32 %v394, %v396
    %v398 = vrot.slane %v390, %v397
    %v400 = vunpack.c.l.s4 1934713408
    %v401 = vunpack.c.0.s8 %v400
    %v402 = vlaneseq
    %v403 = vshrl.u32 %v402, 7
    %v404 = vsub.s32 %v401, %v403
    %v405 = vrot.slane %v391, %v404
    %v406 = vcombine.low %v341, %v357
    %v407 = vcombine.high %v341, %v357
    %v409 = vunpack.c.l.s4 1934713408
    %v410 = vunpack.c.0.s8 %v409
    %v411 = vlaneseq
    %v412 = vshrl.u32 %v411, 7
    %v413 = vsub.s32 %v410, %v412
    %v414 = vrot.slane %v406, %v413
    %v416 = vunpack.c.l.s4 1934713408
    %v417 = vunpack.c.0.s8 %v416
    %v418 = vlaneseq
    %v419 = vshrl.u32 %v418, 7
    %v420 = vsub.s32 %v417, %v419
    %v421 = vrot.slane %v407, %v420
    %v422 = vcombine.low %v366, %v398
    %v423 = vcombine.high %v366, %v398
    %v424 = vcombine.low %v373, %v405
    %v425 = vcombine.high %v373, %v405
    %v426 = vcombine.low %v382, %v414
    %v427 = vcombine.high %v382, %v414
    %v428 = vcombine.low %v389, %v421
    %v429 = vcombine.high %v389, %v421
    %vm430 = vcmask 130048
    %v431 = vsel %vm430, %v422, -inf
    %432 = vmax.xlane.f32.xlu0 %v431
    %v433 = vpop.xlane.xlu0 %432
    %v434 = vsel %vm430, %v423, -inf
    %435 = vmax.xlane.f32.xlu0 %v434
    %v436 = vpop.xlane.xlu0 %435
    %v437 = vsel %vm430, %v424, -inf
    %438 = vmax.xlane.f32.xlu0 %v437
    %v439 = vpop.xlane.xlu0 %438
    %v440 = vsel %vm430, %v425, -inf
    %441 = vmax.xlane.f32.xlu0 %v440
    %v442 = vpop.xlane.xlu0 %441
    %v443 = vsel %vm430, %v426, -inf
    %444 = vmax.xlane.f32.xlu0 %v443
    %v445 = vpop.xlane.xlu0 %444
    %v446 = vsel %vm430, %v427, -inf
    %447 = vmax.xlane.f32.xlu0 %v446
    %v448 = vpop.xlane.xlu0 %447
    %v449 = vsel %vm430, %v428, -inf
    %450 = vmax.xlane.f32.xlu0 %v449
    %v451 = vpop.xlane.xlu0 %450
    %v452 = vsel %vm430, %v429, -inf
    %453 = vmax.xlane.f32.xlu0 %v452
    %v454 = vpop.xlane.xlu0 %453
    %v455 = vlaneseq
    %v456 = vand.u32 %v455, 127
    %vm457 = vcmp.ge.f32.partialorder %v422, %v433
    %vm458 = vcmp.ge.f32.partialorder %v423, %v436
    %vm459 = vcmp.ge.f32.partialorder %v424, %v439
    %vm460 = vcmp.ge.f32.partialorder %v425, %v442
    %vm461 = vcmp.ge.f32.partialorder %v426, %v445
    %vm462 = vcmp.ge.f32.partialorder %v427, %v448
    %vm463 = vcmp.ge.f32.partialorder %v428, %v451
    %vm464 = vcmp.ge.f32.partialorder %v429, %v454
    %v465 = vsel %vm457, %v456, 16
    %v466 = vsel %vm458, %v456, 16
    %v467 = vsel %vm459, %v456, 16
    %v468 = vsel %vm460, %v456, 16
    %v469 = vsel %vm461, %v456, 16
    %v470 = vsel %vm462, %v456, 16
    %v471 = vsel %vm463, %v456, 16
    %v472 = vsel %vm464, %v456, 16
    %v473 = vsel %vm430, %v465, 2147483647
    %v474 = vand.u32 %v473, 65535
    %v475 = vshra.s32 %v473, 16
    %v476 = vcvt.s32.f32 %v474
    %v477 = vcvt.s32.f32 %v475
    %478 = vmin.xlane.f32.xlu0 %v477
    %v479 = vpop.xlane.xlu0 %478
    %vm480 = vcmp.eq.f32.partialorder %v477, %v479
    %v481 = vsel %vm480, %v476, inf
    %482 = vmin.xlane.f32.xlu0 %v481
    %v483 = vpop.xlane.xlu0 %482
    %v484 = vcvt.f32.s32 %v483
    %v485 = vcvt.f32.s32 %v479
    %v486 = vshll.u32 %v485, 16
    %v487 = vadd.s32 %v486, %v484
    %v488 = vsel %vm430, %v466, 2147483647
    %v489 = vand.u32 %v488, 65535
    %v490 = vshra.s32 %v488, 16
    %v491 = vcvt.s32.f32 %v489
    %v492 = vcvt.s32.f32 %v490
    %493 = vmin.xlane.f32.xlu0 %v492
    %v494 = vpop.xlane.xlu0 %493
    %vm495 = vcmp.eq.f32.partialorder %v492, %v494
    %v496 = vsel %vm495, %v491, inf
    %497 = vmin.xlane.f32.xlu0 %v496
    %v498 = vpop.xlane.xlu0 %497
    %v499 = vcvt.f32.s32 %v498
    %v500 = vcvt.f32.s32 %v494
    %v501 = vshll.u32 %v500, 16
    %v502 = vadd.s32 %v501, %v499
    %v503 = vsel %vm430, %v467, 2147483647
    %v504 = vand.u32 %v503, 65535
    %v505 = vshra.s32 %v503, 16
    %v506 = vcvt.s32.f32 %v504
    %v507 = vcvt.s32.f32 %v505
    %508 = vmin.xlane.f32.xlu0 %v507
    %v509 = vpop.xlane.xlu0 %508
    %vm510 = vcmp.eq.f32.partialorder %v507, %v509
    %v511 = vsel %vm510, %v506, inf
    %512 = vmin.xlane.f32.xlu0 %v511
    %v513 = vpop.xlane.xlu0 %512
    %v514 = vcvt.f32.s32 %v513
    %v515 = vcvt.f32.s32 %v509
    %v516 = vshll.u32 %v515, 16
    %v517 = vadd.s32 %v516, %v514
    %v518 = vsel %vm430, %v468, 2147483647
    %v519 = vand.u32 %v518, 65535
    %v520 = vshra.s32 %v518, 16
    %v521 = vcvt.s32.f32 %v519
    %v522 = vcvt.s32.f32 %v520
    %523 = vmin.xlane.f32.xlu0 %v522
    %v524 = vpop.xlane.xlu0 %523
    %vm525 = vcmp.eq.f32.partialorder %v522, %v524
    %v526 = vsel %vm525, %v521, inf
    %527 = vmin.xlane.f32.xlu0 %v526
    %v528 = vpop.xlane.xlu0 %527
    %v529 = vcvt.f32.s32 %v528
    %v530 = vcvt.f32.s32 %v524
    %v531 = vshll.u32 %v530, 16
    %v532 = vadd.s32 %v531, %v529
    %v533 = vsel %vm430, %v469, 2147483647
    %v534 = vand.u32 %v533, 65535
    %v535 = vshra.s32 %v533, 16
    %v536 = vcvt.s32.f32 %v534
    %v537 = vcvt.s32.f32 %v535
    %538 = vmin.xlane.f32.xlu0 %v537
    %v539 = vpop.xlane.xlu0 %538
    %vm540 = vcmp.eq.f32.partialorder %v537, %v539
    %v541 = vsel %vm540, %v536, inf
    %542 = vmin.xlane.f32.xlu0 %v541
    %v543 = vpop.xlane.xlu0 %542
    %v544 = vcvt.f32.s32 %v543
    %v545 = vcvt.f32.s32 %v539
    %v546 = vshll.u32 %v545, 16
    %v547 = vadd.s32 %v546, %v544
    %v548 = vsel %vm430, %v470, 2147483647
    %v549 = vand.u32 %v548, 65535
    %v550 = vshra.s32 %v548, 16
    %v551 = vcvt.s32.f32 %v549
    %v552 = vcvt.s32.f32 %v550
    %553 = vmin.xlane.f32.xlu0 %v552
    %v554 = vpop.xlane.xlu0 %553
    %vm555 = vcmp.eq.f32.partialorder %v552, %v554
    %v556 = vsel %vm555, %v551, inf
    %557 = vmin.xlane.f32.xlu0 %v556
    %v558 = vpop.xlane.xlu0 %557
    %v559 = vcvt.f32.s32 %v558
    %v560 = vcvt.f32.s32 %v554
    %v561 = vshll.u32 %v560, 16
    %v562 = vadd.s32 %v561, %v559
    %v563 = vsel %vm430, %v471, 2147483647
    %v564 = vand.u32 %v563, 65535
    %v565 = vshra.s32 %v563, 16
    %v566 = vcvt.s32.f32 %v564
    %v567 = vcvt.s32.f32 %v565
    %568 = vmin.xlane.f32.xlu0 %v567
    %v569 = vpop.xlane.xlu0 %568
    %vm570 = vcmp.eq.f32.partialorder %v567, %v569
    %v571 = vsel %vm570, %v566, inf
    %572 = vmin.xlane.f32.xlu0 %v571
    %v573 = vpop.xlane.xlu0 %572
    %v574 = vcvt.f32.s32 %v573
    %v575 = vcvt.f32.s32 %v569
    %v576 = vshll.u32 %v575, 16
    %v577 = vadd.s32 %v576, %v574
    %v578 = vsel %vm430, %v472, 2147483647
    %v579 = vand.u32 %v578, 65535
    %v580 = vshra.s32 %v578, 16
    %v581 = vcvt.s32.f32 %v579
    %v582 = vcvt.s32.f32 %v580
    %583 = vmin.xlane.f32.xlu0 %v582
    %v584 = vpop.xlane.xlu0 %583
    %vm585 = vcmp.eq.f32.partialorder %v582, %v584
    %v586 = vsel %vm585, %v581, inf
    %587 = vmin.xlane.f32.xlu0 %v586
    %v588 = vpop.xlane.xlu0 %587
    %v589 = vcvt.f32.s32 %v588
    %v590 = vcvt.f32.s32 %v584
    %v591 = vshll.u32 %v590, 16
    %v592 = vadd.s32 %v591, %v589
    %v593 = vcvt.s32.f32 %v487
    %v594 = vcvt.s32.f32 %v502
    %v595 = vcvt.s32.f32 %v517
    %v596 = vcvt.s32.f32 %v532
    %v597 = vcvt.s32.f32 %v547
    %v598 = vcvt.s32.f32 %v562
    %v599 = vcvt.s32.f32 %v577
    %v600 = vcvt.s32.f32 %v592
    %v601 = vadd.f32 %v593, 1.0
    %v602 = vadd.f32 %v594, 1.0
    %v603 = vadd.f32 %v595, 1.0
    %v604 = vadd.f32 %v596, 1.0
    %v605 = vadd.f32 %v597, 1.0
    %v606 = vadd.f32 %v598, 1.0
    %v607 = vadd.f32 %v599, 1.0
    %v608 = vadd.f32 %v600, 1.0
    %v609 = vpack.c.bf16 %v601, %v601
    %v610 = vpack.c.bf16 %v602, %v602
    %v611 = vpack.c.bf16 %v603, %v603
    %v612 = vpack.c.bf16 %v604, %v604
    %v613 = vpack.c.bf16 %v605, %v605
    %v614 = vpack.c.bf16 %v606, %v606
    %v615 = vpack.c.bf16 %v607, %v607
    %v616 = vpack.c.bf16 %v608, %v608
    %v617 = vld [vmem:[%s5] sm:$0xf]
    %v626 = vunpack.c.l.b16 %v609
    %v627 = vunpack.c.l.b16 %v610
    %v628 = vunpack.c.l.b16 %v611
    %v629 = vunpack.c.l.b16 %v612
    %v630 = vunpack.c.l.b16 %v613
    %v631 = vunpack.c.l.b16 %v614
    %v632 = vunpack.c.l.b16 %v615
    %v633 = vunpack.c.l.b16 %v616
    %v634 = vlaneseq
    %v635 = vshrl.u32 %v634, 7
    %v636 = vsub.s32 %v456, %v635
    %v637 = vrot.slane %v626, %v636
    %v638 = vlaneseq
    %v639 = vshrl.u32 %v638, 7
    %v640 = vsub.s32 %v456, %v639
    %v641 = vrot.slane %v627, %v640
    %v642 = vlaneseq
    %v643 = vshrl.u32 %v642, 7
    %v644 = vsub.s32 %v456, %v643
    %v645 = vrot.slane %v628, %v644
    %v646 = vlaneseq
    %v647 = vshrl.u32 %v646, 7
    %v648 = vsub.s32 %v456, %v647
    %v649 = vrot.slane %v629, %v648
    %v650 = vlaneseq
    %v651 = vshrl.u32 %v650, 7
    %v652 = vsub.s32 %v456, %v651
    %v653 = vrot.slane %v630, %v652
    %v654 = vlaneseq
    %v655 = vshrl.u32 %v654, 7
    %v656 = vsub.s32 %v456, %v655
    %v657 = vrot.slane %v631, %v656
    %v658 = vlaneseq
    %v659 = vshrl.u32 %v658, 7
    %v660 = vsub.s32 %v456, %v659
    %v661 = vrot.slane %v632, %v660
    %v662 = vlaneseq
    %v663 = vshrl.u32 %v662, 7
    %v664 = vsub.s32 %v456, %v663
    %v665 = vrot.slane %v633, %v664
    %vm666 = vcmask 1041409
    %v667 = vsel %vm666, %v641, %v637
    %vm668 = vcmask 1042434
    %v669 = vsel %vm668, %v645, %v667
    %vm670 = vcmask 1043459
    %v671 = vsel %vm670, %v649, %v669
    %vm672 = vcmask 1044484
    %v673 = vsel %vm672, %v653, %v671
    %vm674 = vcmask 1045509
    %v675 = vsel %vm674, %v657, %v673
    %vm676 = vcmask 1046534
    %v677 = vsel %vm676, %v661, %v675
    %vm678 = vcmask 1047559
    %v679 = vsel %vm678, %v665, %v677
    %v680 = vpack.c.b16 %v679, %v679
    %vm681 = vcmask 64512
    %v683 = vsel %vm681, %v680, 0
    %vm685 = vcmask 1043456
    %v687 = vsel %vm685, %v617, 0
    %689 = vmatprep.subr.bf16.mxu0 0
    %690 = vmatpush1.bf16.msra.mxu0 %v687
    %691 = vmatprep.subr.bf16.mxu0 0
    %692 = vmatpush1.bf16.msra.mxu0 0
    %693 = vmatprep.subr.bf16.mxu0 0
    %694 = vmatpush1.bf16.msra.mxu0 0
    %695 = vmatprep.subr.bf16.mxu0 0
    %696 = vmatpush1.bf16.msra.mxu0 0
    %697 = vmatprep.subr.bf16.mxu0 0
    %698 = vmatpush1.bf16.msra.mxu0 0
    %699 = vmatprep.subr.bf16.mxu0 0
    %700 = vmatpush1.bf16.msra.mxu0 0
    %701 = vmatprep.subr.bf16.mxu0 0
    %702 = vmatpush1.bf16.msra.mxu0 0
    %703 = vmatprep.subr.bf16.mxu0 0
    %704 = vmatpush1.bf16.msra.mxu0 0
    %705 = vmatprep.subr.bf16.mxu0 0
    %706 = vmatpush1.bf16.msra.mxu0 0
    %707 = vmatprep.subr.bf16.mxu0 0
    %708 = vmatpush1.bf16.msra.mxu0 0
    %709 = vmatprep.subr.bf16.mxu0 0
    %710 = vmatpush1.bf16.msra.mxu0 0
    %711 = vmatprep.subr.bf16.mxu0 0
    %712 = vmatpush1.bf16.msra.mxu0 0
    %713 = vmatprep.subr.bf16.mxu0 0
    %714 = vmatpush1.bf16.msra.mxu0 0
    %715 = vmatprep.subr.bf16.mxu0 0
    %716 = vmatpush1.bf16.msra.mxu0 0
    %717 = vmatprep.subr.bf16.mxu0 0
    %718 = vmatpush1.bf16.msra.mxu0 0
    %719 = vmatprep.subr.bf16.mxu0 0
    %720 = vmatpush1.bf16.msra.mxu0 0
    %721 = vmatprep.mubr.bf16.mxu0 0
    %722 = vmatmul.mubr.bf16.gmra.mrb[0].mxu0 %v683
    %v723 = vpop.f32.mrb[0].mxu0
    %v724 = vadd.f32 0.0, %v723
    %v725 = vpop.f32.mrb[0].mxu0
    %v726 = vpop.f32.mrb[0].mxu0
    %v727 = vpop.f32.mrb[0].mxu0
    %728 = vdwg.mxu0
    %v729 = vmul.f32 %v724, 0.0033333334
    %v730 = vxor.u32 %v724, 2147483648
    %v731 = vmul.f32 %v730, 1.442695
    %v732 = vpow.pop %v731
    %v733 = vadd.f32 %v732, 1.0
    %v734 = vrcp.pop %v733
    %v735 = vmul.f32 1.0, %v734
    %737 = vrot.lane.b32.xlu0 %v41, 64
    %v738 = vpop.permute.xlu0 %737
    %v740 = vmul.f32 %v735, %v738
    %v741 = vpack.c.bf16 %v729, %v729
    %v742 = vld [vmem:[%s6] sm:$0xf]
    %v743 = vld [vmem:[%s6 + $0x4] sm:$0xf]
    %v744 = vld [vmem:[%s6 + $0x8] sm:$0xf]
    %v745 = vld [vmem:[%s6 + $0xc] sm:$0xf]
    %v746 = vld [vmem:[%s6 + $0x10] sm:$0xf]
    %v747 = vld [vmem:[%s6 + $0x14] sm:$0xf]
    %v748 = vld [vmem:[%s6 + $0x18] sm:$0xf]
    %v749 = vld [vmem:[%s6 + $0x1c] sm:$0xf]
    %v750 = vpack.c.bf16 %v740, %v740
    %v751 = vld [vmem:[%s7] sm:$0xf]
    %v752 = vld [vmem:[%s7 + $0x4] sm:$0xf]
    %v753 = vld [vmem:[%s7 + $0x8] sm:$0xf]
    %v754 = vld [vmem:[%s7 + $0xc] sm:$0xf]
    %v755 = vld [vmem:[%s7 + $0x10] sm:$0xf]
    %v756 = vld [vmem:[%s7 + $0x14] sm:$0xf]
    %v757 = vld [vmem:[%s7 + $0x18] sm:$0xf]
    %v758 = vld [vmem:[%s7 + $0x1c] sm:$0xf]
    %760 = vrot.lane.b32.xlu0 %v750, 64
    %v761 = vpop.permute.xlu0 %760
    %v770 = vunpack.c.l.b16 %v751
    %v771 = vunpack.c.l.b16 %v752
    %v772 = vunpack.c.l.b16 %v753
    %v773 = vunpack.c.l.b16 %v754
    %v774 = vunpack.c.l.b16 %v755
    %v775 = vunpack.c.l.b16 %v756
    %v776 = vunpack.c.l.b16 %v757
    %v777 = vunpack.c.l.b16 %v758
    %v778 = vpack.c.b16 %v771, %v770
    %v779 = vpack.c.b16 %v773, %v772
    %v780 = vpack.c.b16 %v775, %v774
    %v781 = vpack.c.b16 %v777, %v776
    %vm786 = vcmask 523264
    %v788 = vsel %vm786, %v761, 0
    %790 = vmatprep.subr.bf16.mxu0 0
    %791 = vmatpush1.bf16.msra.mxu0 %v778
    %792 = vmatprep.subr.bf16.mxu0 0
    %793 = vmatpush1.bf16.msra.mxu0 %v779
    %794 = vmatprep.subr.bf16.mxu0 0
    %795 = vmatpush1.bf16.msra.mxu0 %v780
    %796 = vmatprep.subr.bf16.mxu0 0
    %797 = vmatpush1.bf16.msra.mxu0 %v781
    %798 = vmatprep.subr.bf16.mxu0 0
    %799 = vmatpush1.bf16.msra.mxu0 0
    %800 = vmatprep.subr.bf16.mxu0 0
    %801 = vmatpush1.bf16.msra.mxu0 0
    %802 = vmatprep.subr.bf16.mxu0 0
    %803 = vmatpush1.bf16.msra.mxu0 0
    %804 = vmatprep.subr.bf16.mxu0 0
    %805 = vmatpush1.bf16.msra.mxu0 0
    %806 = vmatprep.subr.bf16.mxu0 0
    %807 = vmatpush1.bf16.msra.mxu0 0
    %808 = vmatprep.subr.bf16.mxu0 0
    %809 = vmatpush1.bf16.msra.mxu0 0
    %810 = vmatprep.subr.bf16.mxu0 0
    %811 = vmatpush1.bf16.msra.mxu0 0
    %812 = vmatprep.subr.bf16.mxu0 0
    %813 = vmatpush1.bf16.msra.mxu0 0
    %814 = vmatprep.subr.bf16.mxu0 0
    %815 = vmatpush1.bf16.msra.mxu0 0
    %816 = vmatprep.subr.bf16.mxu0 0
    %817 = vmatpush1.bf16.msra.mxu0 0
    %818 = vmatprep.subr.bf16.mxu0 0
    %819 = vmatpush1.bf16.msra.mxu0 0
    %820 = vmatprep.subr.bf16.mxu0 0
    %821 = vmatpush1.bf16.msra.mxu0 0
    %822 = vmatprep.mubr.bf16.mxu0 0
    %823 = vmatmul.mubr.bf16.gmra.mrb[0].mxu0 %v788
    %v824 = vpop.f32.mrb[0].mxu0
    %v825 = vadd.f32 0.0, %v824
    %v826 = vpop.f32.mrb[0].mxu0
    %v827 = vpop.f32.mrb[0].mxu0
    %v828 = vpop.f32.mrb[0].mxu0
    %829 = vdwg.mxu0
    %v838 = vunpack.c.l.b16 %v742
    %v839 = vunpack.c.l.b16 %v743
    %v840 = vunpack.c.l.b16 %v744
    %v841 = vunpack.c.l.b16 %v745
    %v842 = vunpack.c.l.b16 %v746
    %v843 = vunpack.c.l.b16 %v747
    %v844 = vunpack.c.l.b16 %v748
    %v845 = vunpack.c.l.b16 %v749
    %v846 = vpack.c.b16 %v839, %v838
    %v847 = vpack.c.b16 %v841, %v840
    %v848 = vpack.c.b16 %v843, %v842
    %v849 = vpack.c.b16 %v845, %v844
    %v855 = vsel %vm786, %v741, 0
    %857 = vmatprep.subr.bf16.mxu0 0
    %858 = vmatpush1.bf16.msra.mxu0 %v846
    %859 = vmatprep.subr.bf16.mxu0 0
    %860 = vmatpush1.bf16.msra.mxu0 %v847
    %861 = vmatprep.subr.bf16.mxu0 0
    %862 = vmatpush1.bf16.msra.mxu0 %v848
    %863 = vmatprep.subr.bf16.mxu0 0
    %864 = vmatpush1.bf16.msra.mxu0 %v849
    %865 = vmatprep.subr.bf16.mxu0 0
    %866 = vmatpush1.bf16.msra.mxu0 0
    %867 = vmatprep.subr.bf16.mxu0 0
    %868 = vmatpush1.bf16.msra.mxu0 0
    %869 = vmatprep.subr.bf16.mxu0 0
    %870 = vmatpush1.bf16.msra.mxu0 0
    %871 = vmatprep.subr.bf16.mxu0 0
    %872 = vmatpush1.bf16.msra.mxu0 0
    %873 = vmatprep.subr.bf16.mxu0 0
    %874 = vmatpush1.bf16.msra.mxu0 0
    %875 = vmatprep.subr.bf16.mxu0 0
    %876 = vmatpush1.bf16.msra.mxu0 0
    %877 = vmatprep.subr.bf16.mxu0 0
    %878 = vmatpush1.bf16.msra.mxu0 0
    %879 = vmatprep.subr.bf16.mxu0 0
    %880 = vmatpush1.bf16.msra.mxu0 0
    %881 = vmatprep.subr.bf16.mxu0 0
    %882 = vmatpush1.bf16.msra.mxu0 0
    %883 = vmatprep.subr.bf16.mxu0 0
    %884 = vmatpush1.bf16.msra.mxu0 0
    %885 = vmatprep.subr.bf16.mxu0 0
    %886 = vmatpush1.bf16.msra.mxu0 0
    %887 = vmatprep.subr.bf16.mxu0 0
    %888 = vmatpush1.bf16.msra.mxu0 0
    %889 = vmatprep.mubr.bf16.mxu0 0
    %890 = vmatmul.mubr.bf16.gmra.mrb[0].mxu0 %v855
    %v891 = vpop.f32.mrb[0].mxu0
    %v892 = vadd.f32 %v825, %v891
    %v893 = vpop.f32.mrb[0].mxu0
    %v894 = vpop.f32.mrb[0].mxu0
    %v895 = vpop.f32.mrb[0].mxu0
    %896 = vdwg.mxu0
    %v897 = vld [vmem:[%s8] sm:$0x1]
    %v899 = vlaneseq
    %v900 = vshrl.u32 %v899, 7
    %v901 = vsub.s32 0, %v900
    %v902 = vrot.slane %v897, %v901
    %v904 = vadd.f32 %v892, %v902
    %905 = vst [vmem:[#allocation2] sm:$0xff] %v904
    %v914 = vlaneseq
    %v915 = vshrl.u32 %v914, 7
    %v916 = vsub.s32 %v456, %v915
    %v917 = vrot.slane %v601, %v916
    %v918 = vlaneseq
    %v919 = vshrl.u32 %v918, 7
    %v920 = vsub.s32 %v456, %v919
    %v921 = vrot.slane %v602, %v920
    %v922 = vlaneseq
    %v923 = vshrl.u32 %v922, 7
    %v924 = vsub.s32 %v456, %v923
    %v925 = vrot.slane %v603, %v924
    %v926 = vlaneseq
    %v927 = vshrl.u32 %v926, 7
    %v928 = vsub.s32 %v456, %v927
    %v929 = vrot.slane %v604, %v928
    %v930 = vlaneseq
    %v931 = vshrl.u32 %v930, 7
    %v932 = vsub.s32 %v456, %v931
    %v933 = vrot.slane %v605, %v932
    %v934 = vlaneseq
    %v935 = vshrl.u32 %v934, 7
    %v936 = vsub.s32 %v456, %v935
    %v937 = vrot.slane %v606, %v936
    %v938 = vlaneseq
    %v939 = vshrl.u32 %v938, 7
    %v940 = vsub.s32 %v456, %v939
    %v941 = vrot.slane %v607, %v940
    %v942 = vlaneseq
    %v943 = vshrl.u32 %v942, 7
    %v944 = vsub.s32 %v456, %v943
    %v945 = vrot.slane %v608, %v944
    %v946 = vsel %vm666, %v921, %v917
    %v947 = vsel %vm668, %v925, %v946
    %v948 = vsel %vm670, %v929, %v947
    %v949 = vsel %vm672, %v933, %v948
    %v950 = vsel %vm674, %v937, %v949
    %v951 = vsel %vm676, %v941, %v950
    %v952 = vsel %vm678, %v945, %v951
    %954 = vst.msk [vmem:[#allocation4] sm:$0xff] %vm681, %v952
    %v955 = vlaneseq
    %v956 = vshrl.u32 %v955, 7
    %s957 = smul.u32 0, 8
    %v958 = vstv %s957
    %v959 = vadd.s32 %v956, %v958
    %vm960 = vcmp.lt.s32.totalorder %v959, 8
    %v961 = vsel %vm960, 1, 0
    %v962 = vcvt.s32.f32 %v961
    %v963 = vld [vmem:[%s9] sm:$0x1]
    %v965 = vlaneseq
    %v966 = vshrl.u32 %v965, 7
    %v967 = vsub.s32 0, %v966
    %v968 = vrot.slane %v963, %v967
    %v970 = vsub.f32 %v271, %v968
    %v971 = vmul.f32 %v268, %v970
    %972 = vadd.xlane.f32.xlu0 %v971
    %v973 = vpop.xlane.xlu0 %972
    %v974 = vmul.f32 %v973, %v962
    %vm975 = vcmask 7168
    %v976 = vsel %vm975, %v974, 0.0
    %977 = vadd.xlane.f32.xlu0 %v976
    %v978 = vpop.xlane.xlu0 %977
    %v979 = vrot.slane %v978, 4
    %v980 = vadd.f32 %v978, %v979
    %v981 = vrot.slane %v980, 2
    %v982 = vadd.f32 %v980, %v981
    %v983 = vrot.slane %v982, 1
    %v984 = vadd.f32 %v982, %v983
    %s985 = vtos %v984
    %v986 = vsel %vm66, %v904, -inf
    %987 = vmax.xlane.f32.xlu0 %v986
    %v988 = vpop.xlane.xlu0 %987
    %v989 = vsub.f32 %v904, %v988
    %v990 = vmul.f32 %v989, 1.442695
    %v991 = vpow.pop %v990
    %v992 = vsel %vm66, %v991, 0.0
    %993 = vadd.xlane.f32.xlu0 %v992
    %v994 = vpop.xlane.xlu0 %993
    %v995 = vrcp.pop %v994
    %v996 = vmul.f32 %v991, %v995
    %v997 = vsel %vm66, %v41, -inf
    %998 = vmax.xlane.f32.xlu0 %v997
    %v999 = vpop.xlane.xlu0 %998
    %v1000 = vsub.f32 %v41, %v999
    %v1001 = vmul.f32 %v1000, 1.442695
    %v1002 = vpow.pop %v1001
    %v1003 = vsel %vm66, %v1002, 0.0
    %1004 = vadd.xlane.f32.xlu0 %v1003
    %v1005 = vpop.xlane.xlu0 %1004
    %v1006 = vlog2.pop %v1005
    %v1007 = vmul.f32 %v1006, 0.6931472
    %v1008 = vsub.f32 %v1000, %v1007
    %v1009 = vsub.f32 0.0, %v996
    %v1010 = vmul.f32 %v1009, %v1008
    %v1011 = vsel %vm66, %v1010, 0.0
    %1012 = vadd.xlane.f32.xlu0 %v1011
    %v1013 = vpop.xlane.xlu0 %1012
    %v1014 = vmul.f32 %v1013, %v962
    %v1015 = vsel %vm975, %v1014, 0.0
    %1016 = vadd.xlane.f32.xlu0 %v1015
    %v1017 = vpop.xlane.xlu0 %1016
    %v1018 = vrot.slane %v1017, 4
    %v1019 = vadd.f32 %v1017, %v1018
    %v1020 = vrot.slane %v1019, 2
    %v1021 = vadd.f32 %v1019, %v1020
    %v1022 = vrot.slane %v1021, 1
    %v1023 = vadd.f32 %v1021, %v1022
    %s1024 = vtos %v1023
    %vm1025 = vcmp.eq.s32.totalorder %v956, 0
    %vm1026 = vcmp.eq.s32.totalorder %v456, 0
    %vm1027 = vmand %vm1025, %vm1026
    %vm1028 = vcmp.eq.s32.totalorder %v456, 1
    %vm1029 = vmand %vm1025, %vm1028
    %v1030 = vstv %s1024
    %v1031 = vsel %vm1029, %v1030, 0.0
    %v1032 = vstv %s985
    %v1033 = vsel %vm1027, %v1032, %v1031
    %1034 = vst [vmem:[%s12] sm:$0xff] %v1033
    // Predicated region
    $region42: #{dvae_forward.1} parent=1 // pred_check
      _
    $region43: #{dvae_forward.1} parent=1 // pred_check_branch
      %1036 = sbr.rel (0) target = $region45
    $region44: #{dvae_forward.1} parent=1 // pred_region
      %s1038 = ssub.s32 128, 128
      %1039 = vsyncadd [#allocation3], %s1038
      %s1041 = sshll.u32 [#allocation2], 4
      %s1042 = int_to_ptr.vmem [resolvable:$true] %s1041
      %1044 = dma.vmem_to_hbm [thread:$0]  %s1042, 128, %s10, [#allocation3]
    $region45: #{dvae_forward.1} parent=1 // pred_fallthru
      _
    // Predicated region
    $region46: #{dvae_forward.1} parent=1 // pred_check
      _
    $region47: #{dvae_forward.1} parent=1 // pred_check_branch
      %1046 = sbr.rel (0) target = $region49
    $region48: #{dvae_forward.1} parent=1 // pred_region
      %s1048 = ssub.s32 128, 128
      %1049 = vsyncadd [#allocation5], %s1048
      %s1051 = sshll.u32 [#allocation4], 4
      %s1052 = int_to_ptr.vmem [resolvable:$true] %s1051
      %1054 = dma.vmem_to_hbm [thread:$0]  %s1052, 128, %s11, [#allocation5]
    $region49: #{dvae_forward.1} parent=1 // pred_fallthru
      _
    // Predicated region
    $region50: #{dvae_forward.1} parent=1 // pred_check
      _
    $region51: #{dvae_forward.1} parent=1 // pred_check_branch
      %1056 = sbr.rel (0) target = $region53
    $region52: #{dvae_forward.1} parent=1 // pred_region
      _
    $region53: #{dvae_forward.1} parent=1 // pred_fallthru
      _
    // Predicated region
    $region54: #{dvae_forward.1} parent=1 // pred_check
      _
    $region55: #{dvae_forward.1} parent=1 // pred_check_branch
      %1058 = sbr.rel (0) target = $region57
    $region56: #{dvae_forward.1} parent=1 // pred_region
      %1059 = dma.done [#allocation3], 128
    $region57: #{dvae_forward.1} parent=1 // pred_fallthru
      _
    // Predicated region
    $region58: #{dvae_forward.1} parent=1 // pred_check
      _
    $region59: #{dvae_forward.1} parent=1 // pred_check_branch
      %1061 = sbr.rel (0) target = $region61
    $region60: #{dvae_forward.1} parent=1 // pred_region
      %1062 = dma.done [#allocation5], 128
    $region61: #{dvae_forward.1} parent=1 // pred_fallthru
      _
    // Predicated region
    $region62: #{dvae_forward.1} parent=1 // pred_check
      _
    $region63: #{dvae_forward.1} parent=1 // pred_check_branch
      %1064 = sbr.rel (0) target = $region65
    $region64: #{dvae_forward.1} parent=1 // pred_region
      _
    $region65: #{dvae_forward.1} parent=1 // pred_fallthru
      _
    %1065 = vsyncpa [#allocation3], 1
    %1066 = vsyncpa [#allocation5], 1

</llo_original>
